<compile_context>
chip_gen: v5e
topology: v5e:2x2
jax: 0.10.0
libtpu: 0.0.40
codegen_flags: <defaults>
</compile_context>

<pallas_src>
import functools

import jax
import jax.numpy as jnp
from jax import lax
from jax.experimental import pallas as pl
from jax.experimental.pallas import tpu as pltpu


# --------------------------------------------------------------------------- kernels

def _tile_update(p, t, valid, acc_i, acc_u, seg_threshold):
    """Accumulate intersection / union counts of one (TH, W) tile into VMEM scratch."""
    pv = p.astype(jnp.float32) > jnp.float32(seg_threshold)
    # TODO(synk): torch casts target to int8 (wraps for |target| >= 128); the truncating
    # int cast here is identical for the usual binary / small-int masks.
    tv = t.astype(jnp.int32) != 0
    inter = pv & tv
    union = pv | tv
    if valid is not None:
        inter = inter & valid
        union = union & valid
    acc_i[...] += jnp.sum(inter.astype(jnp.int32), keepdims=True)
    acc_u[...] += jnp.sum(union.astype(jnp.int32), keepdims=True)


def _finalize(iou_ref, acc_i, acc_u):
    iou = acc_i[...].astype(jnp.float32) / acc_u[...].astype(jnp.float32)   # (1, 1)
    iou_ref[...] = jnp.broadcast_to(iou.reshape(1, 1, 1), iou_ref.shape)


def _miou_kernel_full(p_ref, t_ref, iou_ref, acc_i, acc_u, *,
                      seg_threshold, tile_h, valid_rows):
    """Full-image variant (no crop arrays). Grid = (batch, row_tile).

    valid_rows is a static int (== H) only when H % tile_h != 0, in which case the
    ragged last tile is masked by row index; otherwise it is None (mask-free path).
    """
    h = pl.program_id(1)

    @pl.when(h == 0)
    def _():
        acc_i[...] = jnp.zeros_like(acc_i)
        acc_u[...] = jnp.zeros_like(acc_u)

    p = p_ref[0]                          # (TH, W)
    t = t_ref[0]
    if valid_rows is not None:
        rows = h * tile_h + lax.broadcasted_iota(jnp.int32, p.shape, 0)
        valid = rows < valid_rows
    else:
        valid = None
    _tile_update(p, t, valid, acc_i, acc_u, seg_threshold)

    @pl.when(h == pl.num_programs(1) - 1)
    def _():
        _finalize(iou_ref, acc_i, acc_u)


def _miou_kernel_cropped(mh_ref, mw_ref, p_ref, t_ref, iou_ref, acc_i, acc_u, *,
                         seg_threshold, tile_h):
    """Cropped variant: per-batch [:mh[b], :mw[b]] handled via an iota validity mask.
    Since mh[b] <= H, the same mask also covers any ragged last row-tile."""
    b = pl.program_id(0)
    h = pl.program_id(1)

    @pl.when(h == 0)
    def _():
        acc_i[...] = jnp.zeros_like(acc_i)
        acc_u[...] = jnp.zeros_like(acc_u)

    p = p_ref[0]                          # (TH, W)
    t = t_ref[0]
    th, w = p.shape
    rows = h * tile_h + lax.broadcasted_iota(jnp.int32, (th, w), 0)
    cols = lax.broadcasted_iota(jnp.int32, (th, w), 1)
    valid = (rows < mh_ref[b]) & (cols < mw_ref[b])
    _tile_update(p, t, valid, acc_i, acc_u, seg_threshold)

    @pl.when(h == pl.num_programs(1) - 1)
    def _():
        _finalize(iou_ref, acc_i, acc_u)


# --------------------------------------------------------------------------- wrapper

def _pick_tile_h(H, W, itemsize, target_block_bytes=4 << 20):
    """Largest row-tile (multiple of 8) keeping an input block under ~4 MiB.
    Prefers an exact divisor of H near the cap (no ragged tail); otherwise returns the
    cap itself and the caller uses a cdiv grid + row mask for the last tile."""
    if H * W * itemsize <= target_block_bytes:
        return H
    cap = min(H, target_block_bytes // max(1, W * itemsize)) // 8 * 8
    cap = max(8, cap)
    if cap >= H:
        return H
    lo = max(8, (3 * cap) // 4)
    for th in range(cap, lo - 1, -8):     # prefer a divisor close to the cap
        if H % th == 0:
            return th
    return cap


def _miou_loss_xla(predict, target, max_height, max_width, seg_threshold):
    """Plain-XLA fallback for tiny inputs (grid/launch overhead would dominate)."""
    B, H, W = target.shape
    rows = jnp.arange(H, dtype=jnp.int32)[None, :, None]
    cols = jnp.arange(W, dtype=jnp.int32)[None, None, :]
    valid = (rows < max_height[:, None, None]) & (cols < max_width[:, None, None])
    pv = predict.astype(jnp.float32) > jnp.float32(seg_threshold)
    tv = target.astype(jnp.int32) != 0
    inter = jnp.sum((pv & tv & valid).astype(jnp.int32), axis=(1, 2))
    union = jnp.sum(((pv | tv) & valid).astype(jnp.int32), axis=(1, 2))
    iou = inter.astype(jnp.float32) / union.astype(jnp.float32)
    return 1.0 - jnp.mean(iou)


def miou_loss(predict, target, max_height=None, max_width=None, seg_threshold=0.5,
              *, tile_h=None, use_pallas=None):
    assert predict.shape == target.shape
    assert predict.ndim == 3, "expected (B, H, W) inputs like the PyTorch module"
    B, H, W = target.shape

    if use_pallas is None:
        use_pallas = B * H * W >= (1 << 18)
    if not use_pallas:
        mh = (jnp.full((B,), H, jnp.int32) if max_height is None
              else jnp.asarray(max_height, jnp.int32))
        mw = (jnp.full((B,), W, jnp.int32) if max_width is None
              else jnp.asarray(max_width, jnp.int32))
        return _miou_loss_xla(predict, target, mh, mw, seg_threshold)

    if tile_h is None:
        itemsize = max(jnp.dtype(predict.dtype).itemsize, jnp.dtype(target.dtype).itemsize)
        tile_h = _pick_tile_h(H, W, itemsize)
    if tile_h <= 0 or tile_h > H or not (tile_h % 8 == 0 or tile_h == H):
        raise ValueError(f"tile_h={tile_h} must be a multiple of 8 (or equal H={H}) "
                         f"and <= H")
    n_h = pl.cdiv(H, tile_h)
    ragged = (H % tile_h) != 0            # last row-tile partially out of bounds

    out_shape = jax.ShapeDtypeStruct((B, 1, 128), jnp.float32)
    scratch = [pltpu.VMEM((1, 1), jnp.int32),   # intersection count
               pltpu.VMEM((1, 1), jnp.int32)]   # union count
    cparams = pltpu.CompilerParams(
        dimension_semantics=("parallel", "arbitrary"),  # batch parallel (v7x megacore)
        vmem_limit_bytes=32 << 20)                      # 2 inputs x 2 bufs x <=4 MiB

    if max_height is None and max_width is None:
        # Full-image specialization: no crop arrays, no scalar prefetch; row mask
        # only compiled in when H is not a multiple of tile_h.
        kernel = functools.partial(_miou_kernel_full, seg_threshold=seg_threshold,
                                   tile_h=tile_h, valid_rows=H if ragged else None)
        grid_spec = pltpu.PrefetchScalarGridSpec(
            num_scalar_prefetch=0,
            grid=(B, n_h),
            in_specs=[
                pl.BlockSpec((1, tile_h, W), lambda b, h: (b, h, 0)),   # predict
                pl.BlockSpec((1, tile_h, W), lambda b, h: (b, h, 0)),   # target
            ],
            out_specs=pl.BlockSpec((1, 1, 128), lambda b, h: (b, 0, 0)),
            scratch_shapes=scratch,
        )
        iou = pl.pallas_call(kernel, out_shape=out_shape, grid_spec=grid_spec,
                             compiler_params=cparams)(predict, target)
    else:
        mh = (jnp.full((B,), H, jnp.int32) if max_height is None
              else jnp.asarray(max_height, jnp.int32))
        mw = (jnp.full((B,), W, jnp.int32) if max_width is None
              else jnp.asarray(max_width, jnp.int32))
        kernel = functools.partial(_miou_kernel_cropped,
                                   seg_threshold=seg_threshold, tile_h=tile_h)
        grid_spec = pltpu.PrefetchScalarGridSpec(
            num_scalar_prefetch=2,                       # max_height, max_width -> SMEM
            grid=(B, n_h),
            in_specs=[
                pl.BlockSpec((1, tile_h, W), lambda b, h, mh_, mw_: (b, h, 0)),
                pl.BlockSpec((1, tile_h, W), lambda b, h, mh_, mw_: (b, h, 0)),
            ],
            out_specs=pl.BlockSpec((1, 1, 128), lambda b, h, mh_, mw_: (b, 0, 0)),
            scratch_shapes=scratch,
        )
        iou = pl.pallas_call(kernel, out_shape=out_shape, grid_spec=grid_spec,
                             compiler_params=cparams)(mh, mw, predict, target)

    # Tiny scalar epilogue (mean over batch + "1 -") in plain JAX glue.
    return 1.0 - jnp.mean(iou[:, 0, 0])


# --------------------------------------------------------------------------- reference

def _ref_miou_loss(predict, target, max_h, max_w, seg_threshold=0.5):
    """Pure-JAX replica of the PyTorch per-batch loop (python-int crops)."""
    B = target.shape[0]
    total = 0.0
    for b in range(B):
        pb = (predict[b, : max_h[b], : max_w[b]] > seg_threshold).astype(jnp.int32)
        tb = target[b, : max_h[b], : max_w[b]].astype(jnp.int32)
        total = total + jnp.sum(pb & tb) / jnp.sum(pb | tb)
    return 1.0 - total / B


if __name__ == "__main__":
    key = jax.random.PRNGKey(0)
    kp, kt, kp2, kt2 = jax.random.split(key, 4)

    # ---------------- divisible H case ----------------
    B, H, W = 2, 16, 16
    predict = jax.random.uniform(kp, (B, H, W), dtype=jnp.float32)
    target = (jax.random.uniform(kt, (B, H, W)) > 0.5).astype(jnp.float32)

    # Default (full H, W) path, single row tile.
    loss = jax.block_until_ready(miou_loss(predict, target, use_pallas=True))
    ref = _ref_miou_loss(predict, target, [H] * B, [W] * B)
    assert jnp.allclose(loss, ref, atol=1e-6), (loss, ref)

    # Full path again with multiple row tiles (exercises init/accumulate/finalize).
    loss_t = jax.block_until_ready(miou_loss(predict, target, use_pallas=True, tile_h=8))
    assert jnp.allclose(loss_t, ref, atol=1e-6), (loss_t, ref)

    # Cropped path (per-batch max_height / max_width) with row tiling.
    mh = [16, 8]
    mw = [12, 16]
    loss_c = jax.block_until_ready(
        miou_loss(predict, target, jnp.array(mh), jnp.array(mw),
                  use_pallas=True, tile_h=8)
    )
    ref_c = _ref_miou_loss(predict, target, mh, mw)
    assert jnp.allclose(loss_c, ref_c, atol=1e-6), (loss_c, ref_c)

    # ---------------- ragged H case (H % tile_h != 0) ----------------
    B2, H2, W2 = 2, 24, 16
    predict2 = jax.random.uniform(kp2, (B2, H2, W2), dtype=jnp.float32)
    target2 = (jax.random.uniform(kt2, (B2, H2, W2)) > 0.5).astype(jnp.float32)

    loss_r = jax.block_until_ready(
        miou_loss(predict2, target2, use_pallas=True, tile_h=16))
    ref_r = _ref_miou_loss(predict2, target2, [H2] * B2, [W2] * B2)
    assert jnp.allclose(loss_r, ref_r, atol=1e-6), (loss_r, ref_r)

    mh2 = [20, 24]
    mw2 = [10, 16]
    loss_rc = jax.block_until_ready(
        miou_loss(predict2, target2, jnp.array(mh2), jnp.array(mw2),
                  use_pallas=True, tile_h=16)
    )
    ref_rc = _ref_miou_loss(predict2, target2, mh2, mw2)
    assert jnp.allclose(loss_rc, ref_rc, atol=1e-6), (loss_rc, ref_rc)

    print("KERNEL_OK")
</pallas_src>

<mosaic_0001>
module attributes {stable_mosaic.version = 11 : i64} {
  func.func @_miou_kernel_full(%arg0: i32, %arg1: i32, %arg2: memref<1x16x16xf32, #tpu.memory_space<vmem>>, %arg3: memref<1x16x16xf32, #tpu.memory_space<vmem>>, %arg4: memref<1x1x128xf32, #tpu.memory_space<vmem>>, %arg5: memref<1x1xi32, #tpu.memory_space<vmem>>, %arg6: memref<1x1xi32, #tpu.memory_space<vmem>>) attributes {dimension_semantics = [#tpu.dimension_semantics<parallel>, #tpu.dimension_semantics<arbitrary>], iteration_bounds = array<i64: 2, 1>, scalar_prefetch = 0 : i64, scratch_operands = 2 : i64, tpu.core_type = #tpu.core_type<tc>, window_params = [{transform_indices = @transform_0, window_bounds = array<i64: 1, 16, 16>}, {transform_indices = @transform_1, window_bounds = array<i64: 1, 16, 16>}, {transform_indices = @transform_2, window_bounds = array<i64: 1, 1, 128>}]} {
    %c0_i32 = arith.constant 0 : i32
    %0 = arith.cmpi eq, %arg1, %c0_i32 : i32
    %1 = arith.extui %0 : i1 to i32
    %c0_i32_0 = arith.constant 0 : i32
    %2 = arith.cmpi ne, %1, %c0_i32_0 : i32
    scf.if %2 {
      %c0_i32_19 = arith.constant 0 : i32
      %35 = vector.broadcast %c0_i32_19 : i32 to vector<1x1xi32>
      %c0_20 = arith.constant 0 : index
      %c0_21 = arith.constant 0 : index
      %36 = vector.load %arg5[%c0_20, %c0_21] : memref<1x1xi32, #tpu.memory_space<vmem>>, vector<1x1xi32>
      tpu.vector_store %arg5[%c0_20, %c0_21], %35 {strides = array<i32>} : memref<1x1xi32, #tpu.memory_space<vmem>>, vector<1x1xi32>,
      %c0_i32_22 = arith.constant 0 : i32
      %37 = vector.broadcast %c0_i32_22 : i32 to vector<1x1xi32>
      %c0_23 = arith.constant 0 : index
      %c0_24 = arith.constant 0 : index
      %38 = vector.load %arg6[%c0_23, %c0_24] : memref<1x1xi32, #tpu.memory_space<vmem>>, vector<1x1xi32>
      tpu.vector_store %arg6[%c0_23, %c0_24], %37 {strides = array<i32>} : memref<1x1xi32, #tpu.memory_space<vmem>>, vector<1x1xi32>,
    } else {
    }
    %c0 = arith.constant 0 : index
    %c0_1 = arith.constant 0 : index
    %c0_2 = arith.constant 0 : index
    %3 = vector.load %arg2[%c0, %c0_1, %c0_2] : memref<1x16x16xf32, #tpu.memory_space<vmem>>, vector<1x16x16xf32>
    %4 = vector.shape_cast %3 : vector<1x16x16xf32> to vector<16x16xf32>
    %c0_3 = arith.constant 0 : index
    %c0_4 = arith.constant 0 : index
    %c0_5 = arith.constant 0 : index
    %5 = vector.load %arg3[%c0_3, %c0_4, %c0_5] : memref<1x16x16xf32, #tpu.memory_space<vmem>>, vector<1x16x16xf32>
    %6 = vector.shape_cast %5 : vector<1x16x16xf32> to vector<16x16xf32>
    %cst = arith.constant 5.000000e-01 : f32
    %7 = vector.broadcast %cst : f32 to vector<16x16xf32>
    %8 = arith.cmpf ogt, %4, %7 : vector<16x16xf32>
    %9 = arith.fptosi %6 : vector<16x16xf32> to vector<16x16xi32>
    %c0_i32_6 = arith.constant 0 : i32
    %10 = vector.broadcast %c0_i32_6 : i32 to vector<16x16xi32>
    %11 = arith.cmpi ne, %9, %10 : vector<16x16xi32>
    %12 = arith.andi %8, %11 : vector<16x16xi1>
    %13 = arith.ori %8, %11 : vector<16x16xi1>
    %c0_7 = arith.constant 0 : index
    %c0_8 = arith.constant 0 : index
    %14 = vector.load %arg5[%c0_7, %c0_8] : memref<1x1xi32, #tpu.memory_space<vmem>>, vector<1x1xi32>
    %15 = arith.extui %12 : vector<16x16xi1> to vector<16x16xi32>
    %16 = vector.shape_cast %15 : vector<16x16xi32> to vector<1x16x16xi32>
    %cst_9 = arith.constant dense<0> : vector<1xi32>
    %17 = vector.multi_reduction <add>, %16, %cst_9 [1, 2] : vector<1x16x16xi32> to vector<1xi32>
    %18 = vector.shape_cast %17 : vector<1xi32> to vector<1x1x1xi32>
    %19 = vector.extract %18[0, 0, 0] : i32 from vector<1x1x1xi32>
    %20 = vector.broadcast %19 : i32 to vector<1x1xi32>
    %21 = arith.addi %14, %20 : vector<1x1xi32>
    %c0_10 = arith.constant 0 : index
    %c0_11 = arith.constant 0 : index
    %22 = vector.load %arg5[%c0_10, %c0_11] : memref<1x1xi32, #tpu.memory_space<vmem>>, vector<1x1xi32>
    tpu.vector_store %arg5[%c0_10, %c0_11], %21 {strides = array<i32>} : memref<1x1xi32, #tpu.memory_space<vmem>>, vector<1x1xi32>,
    %c0_12 = arith.constant 0 : index
    %c0_13 = arith.constant 0 : index
    %23 = vector.load %arg6[%c0_12, %c0_13] : memref<1x1xi32, #tpu.memory_space<vmem>>, vector<1x1xi32>
    %24 = arith.extui %13 : vector<16x16xi1> to vector<16x16xi32>
    %25 = vector.shape_cast %24 : vector<16x16xi32> to vector<1x16x16xi32>
    %cst_14 = arith.constant dense<0> : vector<1xi32>
    %26 = vector.multi_reduction <add>, %25, %cst_14 [1, 2] : vector<1x16x16xi32> to vector<1xi32>
    %27 = vector.shape_cast %26 : vector<1xi32> to vector<1x1x1xi32>
    %28 = vector.extract %27[0, 0, 0] : i32 from vector<1x1x1xi32>
    %29 = vector.broadcast %28 : i32 to vector<1x1xi32>
    %30 = arith.addi %23, %29 : vector<1x1xi32>
    %c0_15 = arith.constant 0 : index
    %c0_16 = arith.constant 0 : index
    %31 = vector.load %arg6[%c0_15, %c0_16] : memref<1x1xi32, #tpu.memory_space<vmem>>, vector<1x1xi32>
    tpu.vector_store %arg6[%c0_15, %c0_16], %30 {strides = array<i32>} : memref<1x1xi32, #tpu.memory_space<vmem>>, vector<1x1xi32>,
    %c0_i32_17 = arith.constant 0 : i32
    %32 = arith.cmpi eq, %arg1, %c0_i32_17 : i32
    %33 = arith.extui %32 : i1 to i32
    %c0_i32_18 = arith.constant 0 : i32
    %34 = arith.cmpi ne, %33, %c0_i32_18 : i32
    scf.if %34 {
      %c0_19 = arith.constant 0 : index
      %c0_20 = arith.constant 0 : index
      %35 = vector.load %arg5[%c0_19, %c0_20] : memref<1x1xi32, #tpu.memory_space<vmem>>, vector<1x1xi32>
      %36 = arith.sitofp %35 : vector<1x1xi32> to vector<1x1xf32>
      %c0_21 = arith.constant 0 : index
      %c0_22 = arith.constant 0 : index
      %37 = vector.load %arg6[%c0_21, %c0_22] : memref<1x1xi32, #tpu.memory_space<vmem>>, vector<1x1xi32>
      %38 = arith.sitofp %37 : vector<1x1xi32> to vector<1x1xf32>
      %39 = arith.divf %36, %38 : vector<1x1xf32>
      %40 = vector.shape_cast %39 : vector<1x1xf32> to vector<1x1x1xf32>
      %41 = vector.shape_cast %40 : vector<1x1x1xf32> to vector<1x1x1xf32>
      %42 = vector.broadcast %41 : vector<1x1x1xf32> to vector<1x1x128xf32>
      %c0_23 = arith.constant 0 : index
      %c0_24 = arith.constant 0 : index
      %c0_25 = arith.constant 0 : index
      %43 = vector.load %arg4[%c0_23, %c0_24, %c0_25] : memref<1x1x128xf32, #tpu.memory_space<vmem>>, vector<1x1x128xf32>
      tpu.vector_store %arg4[%c0_23, %c0_24, %c0_25], %42 {strides = array<i32>} : memref<1x1x128xf32, #tpu.memory_space<vmem>>, vector<1x1x128xf32>,
    } else {
    }
    return
  }
  func.func @transform_0(%arg0: i32, %arg1: i32) -> (i32, i32, i32) {
    %c0_i32 = arith.constant 0 : i32
    %c0_i32_0 = arith.constant 0 : i32
    return %arg0, %arg1, %c0_i32 : i32, i32, i32
  }
  func.func @transform_1(%arg0: i32, %arg1: i32) -> (i32, i32, i32) {
    %c0_i32 = arith.constant 0 : i32
    %c0_i32_0 = arith.constant 0 : i32
    return %arg0, %arg1, %c0_i32 : i32, i32, i32
  }
  func.func @transform_2(%arg0: i32, %arg1: i32) -> (i32, i32, i32) {
    %c0_i32 = arith.constant 0 : i32
    %c0_i32_0 = arith.constant 0 : i32
    %c0_i32_1 = arith.constant 0 : i32
    return %arg0, %c0_i32, %c0_i32_0 : i32, i32, i32
  }
}

</mosaic_0001>

<llo_original>
// kernel: tpu_custom_call.1
$region0: #{tpu_custom_call.1}
  #allocation0 [shape = 'u32[]', space=smem, size = 0x4, offset = 0x4, fixed_abs, tag = 'smem constant byte address 0x4 - core index']
  #allocation1 [shape = 'u32[72,128]{1,0:T(1,128)}', space=vmem, size = 0x9000, scoped, tag = 'internal scratch']
  #allocation2 [shape = 's32[1,1]{1,0:T(1,128)}', space=vmem, size = 0x200, scoped, tag = 'scratch operand']
  #allocation3 [shape = 's32[1,1]{1,0:T(1,128)}', space=vmem, size = 0x200, scoped, tag = 'scratch operand']
  %s0 = inlined_call_operand.hbm [shape: f32[2,16,16], index: 0, kind: input, shape index: {}]
  %s1 = inlined_call_operand.hbm [shape: f32[2,16,16], index: 1, kind: input, shape index: {}]
  %s2 = inlined_call_operand.hbm [shape: f32[2,1,128], index: 2, kind: output, shape index: {}]
  %s3 = sld [smem:[#allocation0]]
  $region57: #{tpu_custom_call.1} parent=0
    _
  %s5 = ssub.s32 1, %s3
  %s6 = scalar_select 0, %s5, %s3
  $region1: #{tpu_custom_call.1} parent=0
    #allocation4 [shape = 'u8[16384]{0}', space=vmem, size = 0x4000, scoped, tag = 'input window, operand 0']
    #allocation5 [shape = 's32[2]{0}', space=sflag, size = 0x8, scoped, tag = 'scoped memory for tpu_custom_call.1']
    #allocation6 [shape = 's32[2]{0}', space=sflag, size = 0x8, scoped, tag = 'scoped memory for tpu_custom_call.1']
    #allocation7 [shape = 'u8[16384]{0}', space=vmem, size = 0x4000, scoped, tag = 'input window, operand 1']
    #allocation8 [shape = 's32[2]{0}', space=sflag, size = 0x8, scoped, tag = 'scoped memory for tpu_custom_call.1']
    #allocation9 [shape = 'u8[1024]{0}', space=vmem, size = 0x400, scoped, tag = 'output window, operand 0']
    %7 = vsyncpa [#allocation5], 0
    %s8 = scalar_lea.sflag [#allocation5], 1
    %9 = vsyncpa %s8, 0
    %10 = vsyncpa [#allocation8], 0
    %s11 = scalar_lea.sflag [#allocation8], 1
    %12 = vsyncpa %s11, 0
    %13 = vsyncpa [#allocation6], 0
    %s14 = scalar_lea.sflag [#allocation6], 1
    %15 = vsyncpa %s14, 0
    loop: start=0, step=1, limit=4
    $region2: #{tpu_custom_call.1} parent=1 // loop_pre_header
      _
    $region3: #{tpu_custom_call.1} parent=1 // loop_header
      %s17 = sphi 0, %s21
      %p18 = scmp.ge.s32.totalorder %s17, 4
      %s24 = sphi 0, %s36
      %s25 = sphi 0, %s32
      %s26 = sphi 0, %s24
      %s27 = sphi 0, %s25
      %s28 = sphi 0, %s26
      %s29 = sphi 0, %s27
      %s41 = sphi 0, %s43
      %s44 = sphi 0, %s41
      %s45 = sphi 0, %s44
      %s61 = sphi 0, %s45
      %s69 = sphi 0, %s71
      %s72 = sphi 0, %s69
      %s73 = sphi 0, %s72
      %s89 = sphi 0, %s73
      %s95 = sphi 0, %s97
      %s98 = sphi 0, %s95
      %s99 = sphi 0, %s98
      %s115 = sphi 0, %s99
    $region4: #{tpu_custom_call.1} parent=1 // loop_header_branch
      %20 = sbr.rel (%p18) target = $region8
    $region5: #{tpu_custom_call.1} parent=1 // loop_body
      %s22 = ssub.s32 %s17, 1
      %s23 = ssub.s32 %s17, 2
      %s30 = sadd.s32 1, %s25
      %p31 = scmp.ge.s32.totalorder %s30, 1
      %s32 = scalar_select %p31, 0, %s30
      %s33 = sadd.s32 1, %s24
      %s34 = scalar_select %p31, %s33, %s24
      %p35 = scmp.ge.s32.totalorder %s34, 2
      %s36 = scalar_select %p35, 0, %s34
      %s37 = ssub.s32 %s24, %s36
      %s38 = ssub.s32 %s25, %s32
      %s39 = sor.u32 %s37, %s38
      %p40 = scmp.eq.s32.totalorder %s39, 0
      %s42 = sadd.s32 %s41, 1
      %s43 = scalar_select %p40, %s41, %s42
      %p46 = pneg %p40
      %p47 = scmp.eq.s32.totalorder %s17, 1
      %p48 = por %p46, %p47
      %p49 = scmp.ne.s32.totalorder %s41, %s44
      %p50 = scmp.eq.s32.totalorder %s17, 0
      %p51 = por %p49, %p50
      %p52 = scmp.ne.s32.totalorder %s41, %s44
      %p53 = scmp.eq.s32.totalorder %s22, 1
      %p54 = por %p52, %p53
      %p55 = scmp.ne.s32.totalorder %s44, %s45
      %p56 = scmp.eq.s32.totalorder %s22, 0
      %p57 = por %p55, %p56
      %p58 = scmp.ne.s32.totalorder %s44, %s45
      %p59 = scmp.eq.s32.totalorder %s23, 1
      %p60 = por %p58, %p59
      %p62 = scmp.ne.s32.totalorder %s45, %s61
      %p63 = scmp.eq.s32.totalorder %s23, 0
      %p64 = por %p62, %p63
      %s65 = ssub.s32 %s24, %s36
      %s66 = ssub.s32 %s25, %s32
      %s67 = sor.u32 %s65, %s66
      %p68 = scmp.eq.s32.totalorder %s67, 0
      %s70 = sadd.s32 %s69, 1
      %s71 = scalar_select %p68, %s69, %s70
      %p74 = pneg %p68
      %p75 = scmp.eq.s32.totalorder %s17, 1
      %p76 = por %p74, %p75
      %p77 = scmp.ne.s32.totalorder %s69, %s72
      %p78 = scmp.eq.s32.totalorder %s17, 0
      %p79 = por %p77, %p78
      %p80 = scmp.ne.s32.totalorder %s69, %s72
      %p81 = scmp.eq.s32.totalorder %s22, 1
      %p82 = por %p80, %p81
      %p83 = scmp.ne.s32.totalorder %s72, %s73
      %p84 = scmp.eq.s32.totalorder %s22, 0
      %p85 = por %p83, %p84
      %p86 = scmp.ne.s32.totalorder %s72, %s73
      %p87 = scmp.eq.s32.totalorder %s23, 1
      %p88 = por %p86, %p87
      %p90 = scmp.ne.s32.totalorder %s73, %s89
      %p91 = scmp.eq.s32.totalorder %s23, 0
      %p92 = por %p90, %p91
      %s93 = ssub.s32 %s24, %s36
      %p94 = scmp.eq.s32.totalorder %s93, 0
      %s96 = sadd.s32 %s95, 1
      %s97 = scalar_select %p94, %s95, %s96
      %p100 = pneg %p94
      %p101 = scmp.eq.s32.totalorder %s17, 1
      %p102 = por %p100, %p101
      %p103 = scmp.ne.s32.totalorder %s95, %s98
      %p104 = scmp.eq.s32.totalorder %s17, 0
      %p105 = por %p103, %p104
      %p106 = scmp.ne.s32.totalorder %s95, %s98
      %p107 = scmp.eq.s32.totalorder %s22, 1
      %p108 = por %p106, %p107
      %p109 = scmp.ne.s32.totalorder %s98, %s99
      %p110 = scmp.eq.s32.totalorder %s22, 0
      %p111 = por %p109, %p110
      %p112 = scmp.ne.s32.totalorder %s98, %s99
      %p113 = scmp.eq.s32.totalorder %s23, 1
      %p114 = por %p112, %p113
      %p116 = scmp.ne.s32.totalorder %s99, %s115
      %p117 = scmp.eq.s32.totalorder %s23, 0
      %p118 = por %p116, %p117
      %p119 = scmp.le.s32.totalorder 1, %s17
      %p120 = scmp.lt.s32.totalorder %s17, 3
      %p121 = pnand %p119, %p120
      %p122 = pneg %p121
      // Predicated region
      $region9: #{tpu_custom_call.1} parent=5 // pred_check
        _
      $region10: #{tpu_custom_call.1} parent=5 // pred_check_branch
        %124 = sbr.rel (%p121) target = $region12
      $region11: #{tpu_custom_call.1} parent=5 // pred_region
        %s125 = ssub.s32 %s17, 1
      $region12: #{tpu_custom_call.1} parent=5 // pred_fallthru
        _
      %p126 = scmp.lt.s32.totalorder %s17, 2
      // Predicated region
      $region13: #{tpu_custom_call.1} parent=5 // pred_check
        %p127 = pneg %p126
      $region14: #{tpu_custom_call.1} parent=5 // pred_check_branch
        %129 = sbr.rel (%p127) target = $region16
      $region15: #{tpu_custom_call.1} parent=5 // pred_region
        // Predicated region
        $region17: #{tpu_custom_call.1} parent=15 // pred_check
          %p130 = pneg %p51
        $region18: #{tpu_custom_call.1} parent=15 // pred_check_branch
          %132 = sbr.rel (%p130) target = $region20
        $region19: #{tpu_custom_call.1} parent=15 // pred_region
          %s133 = sand.u32 %s41, 1
          %s134 = scalar_lea.sflag [#allocation5], %s133
          %s135 = sand.u32 %s41, 1
          %s136 = smul.addr %s135, 16
          %s137 = scalar_lea.vmem [#allocation4], %s136
          %s138 = smul.u32 2, %s25
          %140 = vsyncadd %s134, 0
          %s141 = smul.addr %s24, 2
          %s142 = sadd.s32 %s138, %s141
          %s143 = smul.addr %s142, 8
          %s144 = scalar_lea.hbm %s0, %s143
          %s145 = sshll.u32 %s144, 4
          %s146 = int_to_ptr.hbm [resolvable:$true] %s145
          %s147 = sshll.u32 %s137, 4
          %s148 = int_to_ptr.vmem [resolvable:$true] %s147
          %153 = dma.hbm_to_vmem [thread:$0]  %s146, 256, %s148, %s134, 128, 128, 8
        $region20: #{tpu_custom_call.1} parent=15 // pred_fallthru
          _
        // Predicated region
        $region21: #{tpu_custom_call.1} parent=15 // pred_check
          %p154 = pneg %p79
        $region22: #{tpu_custom_call.1} parent=15 // pred_check_branch
          %156 = sbr.rel (%p154) target = $region24
        $region23: #{tpu_custom_call.1} parent=15 // pred_region
          %s157 = sand.u32 %s69, 1
          %s158 = scalar_lea.sflag [#allocation8], %s157
          %s159 = sand.u32 %s69, 1
          %s160 = smul.addr %s159, 16
          %s161 = scalar_lea.vmem [#allocation7], %s160
          %s162 = smul.u32 2, %s25
          %164 = vsyncadd %s158, 0
          %s165 = smul.addr %s24, 2
          %s166 = sadd.s32 %s162, %s165
          %s167 = smul.addr %s166, 8
          %s168 = scalar_lea.hbm %s1, %s167
          %s169 = sshll.u32 %s168, 4
          %s170 = int_to_ptr.hbm [resolvable:$true] %s169
          %s171 = sshll.u32 %s161, 4
          %s172 = int_to_ptr.vmem [resolvable:$true] %s171
          %177 = dma.hbm_to_vmem [thread:$0]  %s170, 256, %s172, %s158, 128, 128, 8
        $region24: #{tpu_custom_call.1} parent=15 // pred_fallthru
          _
      $region16: #{tpu_custom_call.1} parent=5 // pred_fallthru
        _
      %p178 = scmp.le.s32.totalorder 1, %s17
      %p179 = scmp.lt.s32.totalorder %s17, 3
      %p180 = pnand %p178, %p179
      %p181 = pneg %p180
      // Predicated region
      $region25: #{tpu_custom_call.1} parent=5 // pred_check
        _
      $region26: #{tpu_custom_call.1} parent=5 // pred_check_branch
        %183 = sbr.rel (%p180) target = $region28
      $region27: #{tpu_custom_call.1} parent=5 // pred_region
        %s184 = ssub.s32 %s17, 1
        %s185 = sand.u32 %s44, 1
        %s186 = scalar_lea.sflag [#allocation5], %s185
        %s187 = sand.u32 %s44, 1
        %s188 = smul.addr %s187, 16
        %s189 = scalar_lea.vmem [#allocation4], %s188
        // Predicated region
        $region29: #{tpu_custom_call.1} parent=27 // pred_check
          %p190 = pneg %p57
        $region30: #{tpu_custom_call.1} parent=27 // pred_check_branch
          %192 = sbr.rel (%p190) target = $region32
        $region31: #{tpu_custom_call.1} parent=27 // pred_region
          %194 = dma.done %s186, 256
        $region32: #{tpu_custom_call.1} parent=27 // pred_fallthru
          _
        %s195 = sand.u32 %s72, 1
        %s196 = scalar_lea.sflag [#allocation8], %s195
        %s197 = sand.u32 %s72, 1
        %s198 = smul.addr %s197, 16
        %s199 = scalar_lea.vmem [#allocation7], %s198
        // Predicated region
        $region33: #{tpu_custom_call.1} parent=27 // pred_check
          %p200 = pneg %p85
        $region34: #{tpu_custom_call.1} parent=27 // pred_check_branch
          %202 = sbr.rel (%p200) target = $region36
        $region35: #{tpu_custom_call.1} parent=27 // pred_region
          %204 = dma.done %s196, 256
        $region36: #{tpu_custom_call.1} parent=27 // pred_fallthru
          _
        %s205 = sand.u32 %s44, 1
        %s206 = scalar_lea.sflag [#allocation5], %s205
        %s207 = sand.u32 %s44, 1
        %s208 = smul.addr %s207, 16
        %s209 = scalar_lea.vmem [#allocation4], %s208
        %p210 = pneg %p57
        %p211 = pneg %p54
        %s212 = sand.u32 %s72, 1
        %s213 = scalar_lea.sflag [#allocation8], %s212
        %s214 = sand.u32 %s72, 1
        %s215 = smul.addr %s214, 16
        %s216 = scalar_lea.vmem [#allocation7], %s215
        %p217 = pneg %p85
        %p218 = pneg %p82
        %p219 = pneg %p111
        %p220 = pneg %p108
        %s221 = sand.u32 %s98, 1
        %s222 = scalar_lea.sflag [#allocation6], %s221
        %s223 = sand.u32 %s98, 1
        %s224 = scalar_lea.vmem [#allocation9], %s223
        %s225 = smul.u32 2, %s27
        %s226 = smul.u32 2, %s27
        %p227 = scmp.eq.s32.totalorder %s27, 0
        // Predicated region
        $region37: #{tpu_custom_call.1} parent=27 // pred_check
          %p228 = pneg %p227
        $region38: #{tpu_custom_call.1} parent=27 // pred_check_branch
          %230 = sbr.rel (%p228) target = $region40
        $region39: #{tpu_custom_call.1} parent=27 // pred_region
          %vm231 = vcmask 0
          %232 = vst.msk [vmem:[#allocation2] sm:$0x1] %vm231, 0
          %233 = vst.msk [vmem:[#allocation3] sm:$0x1] %vm231, 0
        $region40: #{tpu_custom_call.1} parent=27 // pred_fallthru
          _
        %v234 = vld [vmem:[%s189] sm:$0xff]
        %v235 = vld [vmem:[%s189 + $0x8] sm:$0xff]
        %v236 = vld [vmem:[%s199] sm:$0xff]
        %v237 = vld [vmem:[%s199 + $0x8] sm:$0xff]
        %vm238 = vcmp.gt.f32.partialorder %v234, 0.5
        %vm239 = vcmp.gt.f32.partialorder %v235, 0.5
        %v240 = vcvt.f32.s32.to.zero.pseudo %v236
        %v241 = vcvt.f32.s32.to.zero.pseudo %v237
        %vm242 = vcmp.ne.s32.totalorder %v240, 0
        %vm243 = vcmp.ne.s32.totalorder %v241, 0
        %vm244 = vmand %vm238, %vm242
        %vm245 = vmand %vm239, %vm243
        %vm246 = vmor %vm238, %vm242
        %vm247 = vmor %vm239, %vm243
        %v248 = vld [vmem:[#allocation2] sm:$0x1]
        %v249 = vsel %vm244, 1, 0
        %v250 = vsel %vm245, 1, 0
        %vm251 = vcmask 130048
        %v252 = vsel %vm251, %v249, 0
        %v253 = vsel %vm251, %v250, 0
        %v254 = vadd.s32 %v252, %v253
        %v255 = vand.u32 %v254, 65535
        %v256 = vshrl.u32 %v254, 16
        %v257 = vcvt.s32.f32 %v255
        %v258 = vcvt.s32.f32 %v256
        %259 = vadd.xlane.f32.xlu0 %v257
        %v260 = vpop.xlane.xlu0 %259
        %261 = vadd.xlane.f32.xlu0 %v258
        %v262 = vpop.xlane.xlu0 %261
        %v263 = vcvt.f32.s32 %v260
        %v264 = vcvt.f32.s32 %v262
        %v265 = vshll.u32 %v264, 16
        %v266 = vadd.s32 %v265, %v263
        %v267 = vrot.slane %v266, 4
        %v268 = vadd.s32 %v266, %v267
        %v269 = vrot.slane %v268, 2
        %v270 = vadd.s32 %v268, %v269
        %v271 = vrot.slane %v270, 1
        %v272 = vadd.s32 %v270, %v271
        %s273 = vtos %v272
        %v274 = vstv %s273
        %v275 = vadd.s32 %v248, %v274
        %vm276 = vcmask 0
        %277 = vst.msk [vmem:[#allocation2] sm:$0x1] %vm276, %v275
        %v278 = vld [vmem:[#allocation3] sm:$0x1]
        %v279 = vsel %vm246, 1, 0
        %v280 = vsel %vm247, 1, 0
        %v281 = vsel %vm251, %v279, 0
        %v282 = vsel %vm251, %v280, 0
        %v283 = vadd.s32 %v281, %v282
        %v284 = vand.u32 %v283, 65535
        %v285 = vshrl.u32 %v283, 16
        %v286 = vcvt.s32.f32 %v284
        %v287 = vcvt.s32.f32 %v285
        %288 = vadd.xlane.f32.xlu0 %v286
        %v289 = vpop.xlane.xlu0 %288
        %290 = vadd.xlane.f32.xlu0 %v287
        %v291 = vpop.xlane.xlu0 %290
        %v292 = vcvt.f32.s32 %v289
        %v293 = vcvt.f32.s32 %v291
        %v294 = vshll.u32 %v293, 16
        %v295 = vadd.s32 %v294, %v292
        %v296 = vrot.slane %v295, 4
        %v297 = vadd.s32 %v295, %v296
        %v298 = vrot.slane %v297, 2
        %v299 = vadd.s32 %v297, %v298
        %v300 = vrot.slane %v299, 1
        %v301 = vadd.s32 %v299, %v300
        %s302 = vtos %v301
        %v303 = vstv %s302
        %v304 = vadd.s32 %v278, %v303
        %305 = vst.msk [vmem:[#allocation3] sm:$0x1] %vm276, %v304
        // Predicated region
        $region41: #{tpu_custom_call.1} parent=27 // pred_check
          %p306 = pneg %p227
        $region42: #{tpu_custom_call.1} parent=27 // pred_check_branch
          %308 = sbr.rel (%p306) target = $region44
        $region43: #{tpu_custom_call.1} parent=27 // pred_region
          %v309 = vld [vmem:[#allocation2] sm:$0x1]
          %v310 = vcvt.s32.f32 %v309
          %v311 = vld [vmem:[#allocation3] sm:$0x1]
          %v312 = vcvt.s32.f32 %v311
          %v313 = vrcp.pop %v312
          %v314 = vmul.f32 %v312, %v313
          %v315 = vsub.f32 1.0, %v314
          %v316 = vmul.f32 %v313, %v315
          %v317 = vadd.f32 %v313, %v316
          %vm318 = vweird.f32 %v312
          %vm319 = vweird.f32 %v313
          %vm320 = vmor %vm318, %vm319
          %v321 = vsel %vm320, %v313, %v317
          %v322 = vand.u32 2147483647, %v312
          %vm323 = vcmp.eq.f32.partialorder %v322, 8.507059e+37
          %v324 = vand.u32 %v312, 2147483648
          %v325 = vor.u32 1.1754944e-38, %v324
          %v326 = vsel %vm323, %v325, %v321
          %v327 = vmul.f32 %v310, %v326
          %329 = vset.pattern.permute.xlu0 0
          %330 = vperm.xlu0 %329, %v327
          %v331 = vpop.permute.xlu0 %330
          %v333 = vperm.slane %v331, 0
          %334 = vst [vmem:[%s224] sm:$0x1] %v333
        $region44: #{tpu_custom_call.1} parent=27 // pred_fallthru
          _
        %s335 = sand.u32 %s98, 1
        %s336 = scalar_lea.sflag [#allocation6], %s335
        %s337 = sand.u32 %s98, 1
        %s338 = scalar_lea.vmem [#allocation9], %s337
        // Predicated region
        $region45: #{tpu_custom_call.1} parent=27 // pred_check
          %p339 = pneg %p108
        $region46: #{tpu_custom_call.1} parent=27 // pred_check_branch
          %341 = sbr.rel (%p339) target = $region48
        $region47: #{tpu_custom_call.1} parent=27 // pred_region
          %343 = vsyncadd %s336, 0
          %s344 = scalar_lea.hbm %s2, %s26
          %s346 = sshll.u32 %s338, 4
          %s347 = int_to_ptr.vmem [resolvable:$true] %s346
          %s348 = sshll.u32 %s344, 4
          %s349 = int_to_ptr.hbm [resolvable:$true] %s348
          %351 = dma.vmem_to_hbm [thread:$0]  %s347, 16, %s349, %s336
        $region48: #{tpu_custom_call.1} parent=27 // pred_fallthru
          _
      $region28: #{tpu_custom_call.1} parent=5 // pred_fallthru
        _
      %p352 = scmp.le.s32.totalorder 2, %s17
      // Predicated region
      $region49: #{tpu_custom_call.1} parent=5 // pred_check
        %p353 = pneg %p352
      $region50: #{tpu_custom_call.1} parent=5 // pred_check_branch
        %355 = sbr.rel (%p353) target = $region52
      $region51: #{tpu_custom_call.1} parent=5 // pred_region
        %s356 = ssub.s32 %s17, 2
        // Predicated region
        $region53: #{tpu_custom_call.1} parent=51 // pred_check
          %p357 = pneg %p114
        $region54: #{tpu_custom_call.1} parent=51 // pred_check_branch
          %359 = sbr.rel (%p357) target = $region56
        $region55: #{tpu_custom_call.1} parent=51 // pred_region
          %s360 = sand.u32 %s99, 1
          %s361 = scalar_lea.sflag [#allocation6], %s360
          %s362 = sand.u32 %s99, 1
          %s363 = scalar_lea.vmem [#allocation9], %s362
          %365 = dma.done %s361, 16
        $region56: #{tpu_custom_call.1} parent=51 // pred_fallthru
          _
      $region52: #{tpu_custom_call.1} parent=5 // pred_fallthru
        _
    $region6: #{tpu_custom_call.1} parent=1 // loop_footer
      %s21 = sadd.s32 1, %s17
    $region7: #{tpu_custom_call.1} parent=1 // loop_footer_branch
      %16 = sbr.rel target = $region3
    $region8: #{tpu_custom_call.1} parent=1 // loop_exit
      _
    %366 = vsyncpa [#allocation5], 1
    %s367 = scalar_lea.sflag [#allocation5], 1
    %368 = vsyncpa %s367, 1
    %369 = vsyncpa [#allocation8], 1
    %s370 = scalar_lea.sflag [#allocation8], 1
    %371 = vsyncpa %s370, 1
    %372 = vsyncpa [#allocation6], 1
    %s373 = scalar_lea.sflag [#allocation6], 1
    %374 = vsyncpa %s373, 1

</llo_original>
